<compile_context>
chip_gen: v6e
topology: v6e:2x2x1
jax: 0.10.0
libtpu: 0.0.40
codegen_flags: <defaults>
</compile_context>

<pallas_src>
import jax
import jax.numpy as jnp
from jax.experimental import pallas as pl
from jax.experimental.pallas import tpu as pltpu


def _round_up(x, m):
    return ((x + m - 1) // m) * m


def _mlp_kernel(x_ref, w1_ref, b1_ref, w2_ref, b2_ref, w3_ref, b3_ref, o_ref):
    # Layer 1: h1 = relu(x @ W1 + b1); bf16 matmul, f32 accumulate + epilogue.
    h1 = jnp.dot(x_ref[...], w1_ref[...], preferred_element_type=jnp.float32)
    h1 = jnp.maximum(h1 + b1_ref[...], 0.0)
    # Layer 2: h2 = relu(h1 @ W2 + b2)
    h2 = jnp.dot(h1.astype(jnp.bfloat16), w2_ref[...],
                 preferred_element_type=jnp.float32)
    h2 = jnp.maximum(h2 + b2_ref[...], 0.0)
    # Layer 3 (lane-padded): y = h2 @ W3 + b3
    y = jnp.dot(h2.astype(jnp.bfloat16), w3_ref[...],
                preferred_element_type=jnp.float32)
    o_ref[...] = (y + b3_ref[...]).astype(o_ref.dtype)


def fully_connected_forward(x_nchw, params, *, tile_b_max=512):
    """Forward pass of FullyConnectedRegularized.

    x_nchw: [B, C, H, W] float32 (any trailing shape; flattened per row).
    params: dict with w1,b1,w2,b2,w3,b3 where wK is [in, out], bK is [1, out]
            (i.e. torch Linear weight transposed).
    """
    B = x_nchw.shape[0]
    x = x_nchw.reshape(B, -1)                      # == torch x.view(B, -1)
    n_input = x.shape[1]
    hidden = params["w1"].shape[1]
    n_classes = params["w3"].shape[1]

    # ---- lane-dense padding of the final layer (n_classes -> mult of 128) ----
    n_cls_pad = _round_up(max(n_classes, 128), 128)
    w3 = params["w3"]
    b3 = params["b3"]
    if n_cls_pad != n_classes:
        w3 = jnp.pad(w3, ((0, 0), (0, n_cls_pad - n_classes)))
        b3 = jnp.pad(b3, ((0, 0), (0, n_cls_pad - n_classes)))

    # ---- batch tiling: pad B to a multiple of TILE_B (mult of 16 for bf16) ----
    if _round_up(B, 16) <= tile_b_max:
        tile_b = _round_up(B, 16)                  # single grid step
    else:
        tile_b = _round_up(tile_b_max, 16)         # multiple of 16
    b_pad = _round_up(B, tile_b)
    if b_pad != B:
        x = jnp.pad(x, ((0, b_pad - B), (0, 0)))

    # ---- bf16 matmul operands, f32 biases ----
    x_bf = x.astype(jnp.bfloat16)
    w1 = params["w1"].astype(jnp.bfloat16)
    w2 = params["w2"].astype(jnp.bfloat16)
    w3 = w3.astype(jnp.bfloat16)
    b1 = params["b1"].astype(jnp.float32)
    b2 = params["b2"].astype(jnp.float32)
    b3 = b3.astype(jnp.float32)

    grid = (b_pad // tile_b,)

    out = pl.pallas_call(
        _mlp_kernel,
        out_shape=jax.ShapeDtypeStruct((b_pad, n_cls_pad), jnp.float32),
        grid_spec=pltpu.PrefetchScalarGridSpec(
            num_scalar_prefetch=0,
            grid=grid,
            in_specs=[
                # x: tiled along batch, pipelined (double-buffered by default).
                pl.BlockSpec((tile_b, n_input), lambda i: (i, 0)),
                # Weights / biases: constant index map -> fetched once,
                # VMEM-resident across all grid steps.
                pl.BlockSpec((n_input, hidden), lambda i: (0, 0)),
                pl.BlockSpec((1, hidden), lambda i: (0, 0)),
                pl.BlockSpec((hidden, hidden), lambda i: (0, 0)),
                pl.BlockSpec((1, hidden), lambda i: (0, 0)),
                pl.BlockSpec((hidden, n_cls_pad), lambda i: (0, 0)),
                pl.BlockSpec((1, n_cls_pad), lambda i: (0, 0)),
            ],
            out_specs=pl.BlockSpec((tile_b, n_cls_pad), lambda i: (i, 0)),
        ),
        compiler_params=pltpu.CompilerParams(
            dimension_semantics=("parallel",),     # megacore sharding on v7x
            vmem_limit_bytes=32 * 1024 * 1024,     # headroom on v7x's 64 MiB
        ),
    )(x_bf, w1, b1, w2, b2, w3, b3)

    return out[:B, :n_classes]


def init_params(key, n_input, n_classes, hidden=256, dtype=jnp.float32):
    """Deterministic synthetic init mimicking nn.Linear shapes.

    torch Linear stores weight [out, in]; we store the transpose [in, out]
    so the kernel can do x @ W directly.
    """
    keys = jax.random.split(key, 6)

    def linear(kw, kb, fan_in, fan_out):
        bound = 1.0 / jnp.sqrt(fan_in)
        w = jax.random.uniform(kw, (fan_in, fan_out), dtype, -bound, bound)
        b = jax.random.uniform(kb, (1, fan_out), dtype, -bound, bound)
        return w, b

    w1, b1 = linear(keys[0], keys[1], n_input, hidden)
    w2, b2 = linear(keys[2], keys[3], hidden, hidden)
    w3, b3 = linear(keys[4], keys[5], hidden, n_classes)
    return {"w1": w1, "b1": b1, "w2": w2, "b2": b2, "w3": w3, "b3": b3}


if __name__ == "__main__":
    key = jax.random.PRNGKey(0)
    k_x, k_p = jax.random.split(key)

    B, C, H, W = 2, 4, 16, 16
    n_input = C * H * W       # 1024
    n_classes = 10

    x = jax.random.normal(k_x, (B, C, H, W), jnp.float32)
    params = init_params(k_p, n_input, n_classes)

    y = fully_connected_forward(x, params)
    y = jax.block_until_ready(y)

    # Reference in plain JAX with the same bf16-matmul / f32-accumulate recipe.
    xr = x.reshape(B, -1).astype(jnp.bfloat16)
    w1b = params["w1"].astype(jnp.bfloat16)
    w2b = params["w2"].astype(jnp.bfloat16)
    w3b = params["w3"].astype(jnp.bfloat16)
    h1 = jnp.maximum(
        jnp.dot(xr, w1b, preferred_element_type=jnp.float32) + params["b1"], 0.0)
    h2 = jnp.maximum(
        jnp.dot(h1.astype(jnp.bfloat16), w2b,
                preferred_element_type=jnp.float32) + params["b2"], 0.0)
    y_ref = (jnp.dot(h2.astype(jnp.bfloat16), w3b,
                     preferred_element_type=jnp.float32) + params["b3"])

    assert y.shape == (B, n_classes)
    assert jnp.allclose(y, y_ref, atol=1e-2, rtol=1e-2)

    print("KERNEL_OK")
</pallas_src>

<mosaic_0001>
module attributes {stable_mosaic.version = 11 : i64} {
  func.func @_mlp_kernel(%arg0: i32, %arg1: memref<16x1024xbf16, #tpu.memory_space<vmem>>, %arg2: memref<1024x256xbf16, #tpu.memory_space<vmem>>, %arg3: memref<1x256xf32, #tpu.memory_space<vmem>>, %arg4: memref<256x256xbf16, #tpu.memory_space<vmem>>, %arg5: memref<1x256xf32, #tpu.memory_space<vmem>>, %arg6: memref<256x128xbf16, #tpu.memory_space<vmem>>, %arg7: memref<1x128xf32, #tpu.memory_space<vmem>>, %arg8: memref<16x128xf32, #tpu.memory_space<vmem>>) attributes {dimension_semantics = [#tpu.dimension_semantics<parallel>], iteration_bounds = array<i64: 1>, scalar_prefetch = 0 : i64, scratch_operands = 0 : i64, tpu.core_type = #tpu.core_type<tc>, window_params = [{transform_indices = @transform_0, window_bounds = array<i64: 16, 1024>}, {pipeline_mode = #tpu.pipeline_mode<synchronous>, transform_indices = @transform_1, window_bounds = array<i64: 1024, 256>}, {pipeline_mode = #tpu.pipeline_mode<synchronous>, transform_indices = @transform_2, window_bounds = array<i64: 1, 256>}, {pipeline_mode = #tpu.pipeline_mode<synchronous>, transform_indices = @transform_3, window_bounds = array<i64: 256, 256>}, {pipeline_mode = #tpu.pipeline_mode<synchronous>, transform_indices = @transform_4, window_bounds = array<i64: 1, 256>}, {pipeline_mode = #tpu.pipeline_mode<synchronous>, transform_indices = @transform_5, window_bounds = array<i64: 256, 128>}, {pipeline_mode = #tpu.pipeline_mode<synchronous>, transform_indices = @transform_6, window_bounds = array<i64: 1, 128>}, {transform_indices = @transform_7, window_bounds = array<i64: 16, 128>}]} {
    %c0 = arith.constant 0 : index
    %c0_0 = arith.constant 0 : index
    %0 = vector.load %arg1[%c0, %c0_0] : memref<16x1024xbf16, #tpu.memory_space<vmem>>, vector<16x1024xbf16>
    %c0_1 = arith.constant 0 : index
    %c0_2 = arith.constant 0 : index
    %1 = vector.load %arg2[%c0_1, %c0_2] : memref<1024x256xbf16, #tpu.memory_space<vmem>>, vector<1024x256xbf16>
    %cst = arith.constant dense<0.000000e+00> : vector<16x256xf32>
    %2 = tpu.matmul %0, %1, %cst {dimension_numbers = #tpu.dot_dimension_numbers<[1], [0], [0], [1], [0, 0, 1, 1], [], []>} : vector<16x1024xbf16>, vector<1024x256xbf16>, vector<16x256xf32> -> vector<16x256xf32>
    %c0_3 = arith.constant 0 : index
    %c0_4 = arith.constant 0 : index
    %3 = vector.load %arg3[%c0_3, %c0_4] : memref<1x256xf32, #tpu.memory_space<vmem>>, vector<1x256xf32>
    %4 = vector.broadcast %3 : vector<1x256xf32> to vector<16x256xf32>
    %5 = arith.addf %2, %4 : vector<16x256xf32>
    %cst_5 = arith.constant 0.000000e+00 : f32
    %6 = vector.broadcast %cst_5 : f32 to vector<16x256xf32>
    %7 = arith.maximumf %5, %6 : vector<16x256xf32>
    %8 = arith.truncf %7 : vector<16x256xf32> to vector<16x256xbf16>
    %c0_6 = arith.constant 0 : index
    %c0_7 = arith.constant 0 : index
    %9 = vector.load %arg4[%c0_6, %c0_7] : memref<256x256xbf16, #tpu.memory_space<vmem>>, vector<256x256xbf16>
    %cst_8 = arith.constant dense<0.000000e+00> : vector<16x256xf32>
    %10 = tpu.matmul %8, %9, %cst_8 {dimension_numbers = #tpu.dot_dimension_numbers<[1], [0], [0], [1], [0, 0, 1, 1], [], []>} : vector<16x256xbf16>, vector<256x256xbf16>, vector<16x256xf32> -> vector<16x256xf32>
    %c0_9 = arith.constant 0 : index
    %c0_10 = arith.constant 0 : index
    %11 = vector.load %arg5[%c0_9, %c0_10] : memref<1x256xf32, #tpu.memory_space<vmem>>, vector<1x256xf32>
    %12 = vector.broadcast %11 : vector<1x256xf32> to vector<16x256xf32>
    %13 = arith.addf %10, %12 : vector<16x256xf32>
    %cst_11 = arith.constant 0.000000e+00 : f32
    %14 = vector.broadcast %cst_11 : f32 to vector<16x256xf32>
    %15 = arith.maximumf %13, %14 : vector<16x256xf32>
    %16 = arith.truncf %15 : vector<16x256xf32> to vector<16x256xbf16>
    %c0_12 = arith.constant 0 : index
    %c0_13 = arith.constant 0 : index
    %17 = vector.load %arg6[%c0_12, %c0_13] : memref<256x128xbf16, #tpu.memory_space<vmem>>, vector<256x128xbf16>
    %cst_14 = arith.constant dense<0.000000e+00> : vector<16x128xf32>
    %18 = tpu.matmul %16, %17, %cst_14 {dimension_numbers = #tpu.dot_dimension_numbers<[1], [0], [0], [1], [0, 0, 1, 1], [], []>} : vector<16x256xbf16>, vector<256x128xbf16>, vector<16x128xf32> -> vector<16x128xf32>
    %c0_15 = arith.constant 0 : index
    %c0_16 = arith.constant 0 : index
    %19 = vector.load %arg7[%c0_15, %c0_16] : memref<1x128xf32, #tpu.memory_space<vmem>>, vector<1x128xf32>
    %20 = vector.broadcast %19 : vector<1x128xf32> to vector<16x128xf32>
    %21 = arith.addf %18, %20 : vector<16x128xf32>
    %c0_17 = arith.constant 0 : index
    %c0_18 = arith.constant 0 : index
    %22 = vector.load %arg8[%c0_17, %c0_18] : memref<16x128xf32, #tpu.memory_space<vmem>>, vector<16x128xf32>
    tpu.vector_store %arg8[%c0_17, %c0_18], %21 {strides = array<i32>} : memref<16x128xf32, #tpu.memory_space<vmem>>, vector<16x128xf32>,
    return
  }
  func.func @transform_0(%arg0: i32) -> (i32, i32) {
    %c0_i32 = arith.constant 0 : i32
    %c0_i32_0 = arith.constant 0 : i32
    return %arg0, %c0_i32 : i32, i32
  }
  func.func @transform_1(%arg0: i32) -> (i32, i32) {
    %c0_i32 = arith.constant 0 : i32
    %c0_i32_0 = arith.constant 0 : i32
    %c0_i32_1 = arith.constant 0 : i32
    return %c0_i32, %c0_i32_0 : i32, i32
  }
  func.func @transform_2(%arg0: i32) -> (i32, i32) {
    %c0_i32 = arith.constant 0 : i32
    %c0_i32_0 = arith.constant 0 : i32
    %c0_i32_1 = arith.constant 0 : i32
    return %c0_i32, %c0_i32_0 : i32, i32
  }
  func.func @transform_3(%arg0: i32) -> (i32, i32) {
    %c0_i32 = arith.constant 0 : i32
    %c0_i32_0 = arith.constant 0 : i32
    %c0_i32_1 = arith.constant 0 : i32
    return %c0_i32, %c0_i32_0 : i32, i32
  }
  func.func @transform_4(%arg0: i32) -> (i32, i32) {
    %c0_i32 = arith.constant 0 : i32
    %c0_i32_0 = arith.constant 0 : i32
    %c0_i32_1 = arith.constant 0 : i32
    return %c0_i32, %c0_i32_0 : i32, i32
  }
  func.func @transform_5(%arg0: i32) -> (i32, i32) {
    %c0_i32 = arith.constant 0 : i32
    %c0_i32_0 = arith.constant 0 : i32
    %c0_i32_1 = arith.constant 0 : i32
    return %c0_i32, %c0_i32_0 : i32, i32
  }
  func.func @transform_6(%arg0: i32) -> (i32, i32) {
    %c0_i32 = arith.constant 0 : i32
    %c0_i32_0 = arith.constant 0 : i32
    %c0_i32_1 = arith.constant 0 : i32
    return %c0_i32, %c0_i32_0 : i32, i32
  }
  func.func @transform_7(%arg0: i32) -> (i32, i32) {
    %c0_i32 = arith.constant 0 : i32
    %c0_i32_0 = arith.constant 0 : i32
    return %arg0, %c0_i32 : i32, i32
  }
}

</mosaic_0001>

<llo_original>
// kernel: tpu_custom_call.1
$region0: #{tpu_custom_call.1}
  #allocation0 [shape = 'u32[]', space=smem, size = 0x4, offset = 0x4, fixed_abs, tag = 'smem constant byte address 0x4 - core index']
  #allocation1 [shape = 'u32[144,128]{1,0:T(1,128)}', space=vmem, size = 0x12000, scoped, tag = 'internal scratch']
  %s0 = inlined_call_operand.hbm [shape: bf16[16,1024], index: 0, kind: input, shape index: {}]
  %s1 = inlined_call_operand.hbm [shape: bf16[1024,256], index: 1, kind: input, shape index: {}]
  %s2 = inlined_call_operand.vmem [shape: f32[1,256], index: 2, kind: input, shape index: {}]
  %s3 = inlined_call_operand.hbm [shape: bf16[256,256], index: 3, kind: input, shape index: {}]
  %s4 = inlined_call_operand.vmem [shape: f32[1,256], index: 4, kind: input, shape index: {}]
  %s5 = inlined_call_operand.hbm [shape: bf16[256,128], index: 5, kind: input, shape index: {}]
  %s6 = inlined_call_operand.vmem [shape: f32[1,128], index: 6, kind: input, shape index: {}]
  %s7 = inlined_call_operand.hbm [shape: f32[16,128], index: 7, kind: output, shape index: {}]
  %s8 = sld [smem:[#allocation0]]
  $region54: #{tpu_custom_call.1} parent=0
    _
  %s10 = ssub.s32 1, %s8
  %s11 = scalar_select 0, %s10, %s8
  $region1: #{tpu_custom_call.1} parent=0
    #allocation2 [shape = 'u8[32768]{0}', space=vmem, size = 0x8000, scoped, tag = 'input window, operand 0, single buffered']
    #allocation3 [shape = 's32[1]{0}', space=sflag, size = 0x4, scoped, tag = 'scoped memory for tpu_custom_call.1']
    #allocation4 [shape = 's32[1]{0}', space=sflag, size = 0x4, scoped, tag = 'scoped memory for tpu_custom_call.1']
    #allocation5 [shape = 'u8[524288]{0}', space=vmem, size = 0x80000, scoped, tag = 'input window, operand 1, single buffered']
    #allocation6 [shape = 's32[1]{0}', space=sflag, size = 0x4, scoped, tag = 'scoped memory for tpu_custom_call.1']
    #allocation7 [shape = 'u8[131072]{0}', space=vmem, size = 0x20000, scoped, tag = 'input window, operand 3, single buffered']
    #allocation8 [shape = 'u8[65536]{0}', space=vmem, size = 0x10000, scoped, tag = 'input window, operand 5, single buffered']
    #allocation9 [shape = 's32[1]{0}', space=sflag, size = 0x4, scoped, tag = 'scoped memory for tpu_custom_call.1']
    #allocation10 [shape = 'u8[8192]{0}', space=vmem, size = 0x2000, scoped, tag = 'output window, operand 0, single buffered']
    %12 = vsyncpa [#allocation3], 0
    %13 = vsyncpa [#allocation6], 0
    %14 = vsyncpa [#allocation9], 0
    %15 = vsyncpa [#allocation4], 0
    // Predicated region
    $region2: #{tpu_custom_call.1} parent=1 // pred_check
      _
    $region3: #{tpu_custom_call.1} parent=1 // pred_check_branch
      %17 = sbr.rel (0) target = $region5
    $region4: #{tpu_custom_call.1} parent=1 // pred_region
      %s19 = ssub.s32 1024, 1024
      %20 = vsyncadd [#allocation3], %s19
      %s21 = sshll.u32 [#allocation2], 4
      %s22 = int_to_ptr.vmem [resolvable:$true] %s21
      %27 = dma.hbm_to_vmem [thread:$0]  %s0, 1024, %s22, [#allocation3], 512, 512, 32
    $region5: #{tpu_custom_call.1} parent=1 // pred_fallthru
      _
    // Predicated region
    $region6: #{tpu_custom_call.1} parent=1 // pred_check
      _
    $region7: #{tpu_custom_call.1} parent=1 // pred_check_branch
      %29 = sbr.rel (0) target = $region9
    $region8: #{tpu_custom_call.1} parent=1 // pred_region
      %s31 = ssub.s32 16384, 16384
      %32 = vsyncadd [#allocation6], %s31
      %s33 = sshll.u32 [#allocation5], 4
      %s34 = int_to_ptr.vmem [resolvable:$true] %s33
      %39 = dma.hbm_to_vmem [thread:$0]  %s1, 16384, %s34, [#allocation6], 128, 128, 8
    $region9: #{tpu_custom_call.1} parent=1 // pred_fallthru
      _
    // Predicated region
    $region10: #{tpu_custom_call.1} parent=1 // pred_check
      _
    $region11: #{tpu_custom_call.1} parent=1 // pred_check_branch
      %41 = sbr.rel (0) target = $region13
    $region12: #{tpu_custom_call.1} parent=1 // pred_region
      _
    $region13: #{tpu_custom_call.1} parent=1 // pred_fallthru
      _
    // Predicated region
    $region14: #{tpu_custom_call.1} parent=1 // pred_check
      _
    $region15: #{tpu_custom_call.1} parent=1 // pred_check_branch
      %43 = sbr.rel (0) target = $region17
    $region16: #{tpu_custom_call.1} parent=1 // pred_region
      %s45 = ssub.s32 4096, 4096
      %46 = vsyncadd [#allocation6], %s45
      %s47 = sshll.u32 [#allocation7], 4
      %s48 = int_to_ptr.vmem [resolvable:$true] %s47
      %53 = dma.hbm_to_vmem [thread:$0]  %s3, 4096, %s48, [#allocation6], 128, 128, 8
    $region17: #{tpu_custom_call.1} parent=1 // pred_fallthru
      _
    // Predicated region
    $region18: #{tpu_custom_call.1} parent=1 // pred_check
      _
    $region19: #{tpu_custom_call.1} parent=1 // pred_check_branch
      %55 = sbr.rel (0) target = $region21
    $region20: #{tpu_custom_call.1} parent=1 // pred_region
      _
    $region21: #{tpu_custom_call.1} parent=1 // pred_fallthru
      _
    // Predicated region
    $region22: #{tpu_custom_call.1} parent=1 // pred_check
      _
    $region23: #{tpu_custom_call.1} parent=1 // pred_check_branch
      %57 = sbr.rel (0) target = $region25
    $region24: #{tpu_custom_call.1} parent=1 // pred_region
      %s59 = ssub.s32 2048, 2048
      %60 = vsyncadd [#allocation9], %s59
      %s61 = sshll.u32 [#allocation8], 4
      %s62 = int_to_ptr.vmem [resolvable:$true] %s61
      %67 = dma.hbm_to_vmem [thread:$0]  %s5, 2048, %s62, [#allocation9], 64, 64, 4
    $region25: #{tpu_custom_call.1} parent=1 // pred_fallthru
      _
    // Predicated region
    $region26: #{tpu_custom_call.1} parent=1 // pred_check
      _
    $region27: #{tpu_custom_call.1} parent=1 // pred_check_branch
      %69 = sbr.rel (0) target = $region29
    $region28: #{tpu_custom_call.1} parent=1 // pred_region
      _
    $region29: #{tpu_custom_call.1} parent=1 // pred_fallthru
      _
    // Predicated region
    $region30: #{tpu_custom_call.1} parent=1 // pred_check
      _
    $region31: #{tpu_custom_call.1} parent=1 // pred_check_branch
      %71 = sbr.rel (0) target = $region33
    $region32: #{tpu_custom_call.1} parent=1 // pred_region
      %72 = dma.done [#allocation3], 1024
    $region33: #{tpu_custom_call.1} parent=1 // pred_fallthru
      _
    // Predicated region
    $region34: #{tpu_custom_call.1} parent=1 // pred_check
      _
    $region35: #{tpu_custom_call.1} parent=1 // pred_check_branch
      %74 = sbr.rel (0) target = $region37
    $region36: #{tpu_custom_call.1} parent=1 // pred_region
      %75 = dma.done [#allocation6], 16384
    $region37: #{tpu_custom_call.1} parent=1 // pred_fallthru
      _
    // Predicated region
    $region38: #{tpu_custom_call.1} parent=1 // pred_check
      _
    $region39: #{tpu_custom_call.1} parent=1 // pred_check_branch
      %77 = sbr.rel (0) target = $region41
    $region40: #{tpu_custom_call.1} parent=1 // pred_region
      %78 = dma.done [#allocation6], 4096
    $region41: #{tpu_custom_call.1} parent=1 // pred_fallthru
      _
    // Predicated region
    $region42: #{tpu_custom_call.1} parent=1 // pred_check
      _
    $region43: #{tpu_custom_call.1} parent=1 // pred_check_branch
      %80 = sbr.rel (0) target = $region45
    $region44: #{tpu_custom_call.1} parent=1 // pred_region
      %81 = dma.done [#allocation9], 2048
    $region45: #{tpu_custom_call.1} parent=1 // pred_fallthru
      _
    %v83 = vld [vmem:[#allocation2] sm:$0xff]
    %v84 = vld [vmem:[#allocation2 + $0x8] sm:$0xff]
    %v85 = vld [vmem:[#allocation2 + $0x10] sm:$0xff]
    %v86 = vld [vmem:[#allocation2 + $0x18] sm:$0xff]
    %v87 = vld [vmem:[#allocation2 + $0x20] sm:$0xff]
    %v88 = vld [vmem:[#allocation2 + $0x28] sm:$0xff]
    %v89 = vld [vmem:[#allocation2 + $0x30] sm:$0xff]
    %v90 = vld [vmem:[#allocation2 + $0x38] sm:$0xff]
    %v91 = vld [vmem:[#allocation5] sm:$0xff]
    %v92 = vld [vmem:[#allocation5 + $0x8] sm:$0xff]
    %v93 = vld [vmem:[#allocation5 + $0x10] sm:$0xff]
    %v94 = vld [vmem:[#allocation5 + $0x18] sm:$0xff]
    %v95 = vld [vmem:[#allocation5 + $0x20] sm:$0xff]
    %v96 = vld [vmem:[#allocation5 + $0x28] sm:$0xff]
    %v97 = vld [vmem:[#allocation5 + $0x30] sm:$0xff]
    %v98 = vld [vmem:[#allocation5 + $0x38] sm:$0xff]
    %v99 = vld [vmem:[#allocation5 + $0x40] sm:$0xff]
    %v100 = vld [vmem:[#allocation5 + $0x48] sm:$0xff]
    %v101 = vld [vmem:[#allocation5 + $0x50] sm:$0xff]
    %v102 = vld [vmem:[#allocation5 + $0x58] sm:$0xff]
    %v103 = vld [vmem:[#allocation5 + $0x60] sm:$0xff]
    %v104 = vld [vmem:[#allocation5 + $0x68] sm:$0xff]
    %v105 = vld [vmem:[#allocation5 + $0x70] sm:$0xff]
    %v106 = vld [vmem:[#allocation5 + $0x78] sm:$0xff]
    %v107 = vld [vmem:[#allocation5 + $0x80] sm:$0xff]
    %v108 = vld [vmem:[#allocation5 + $0x88] sm:$0xff]
    %v109 = vld [vmem:[#allocation5 + $0x90] sm:$0xff]
    %v110 = vld [vmem:[#allocation5 + $0x98] sm:$0xff]
    %v111 = vld [vmem:[#allocation5 + $0xa0] sm:$0xff]
    %v112 = vld [vmem:[#allocation5 + $0xa8] sm:$0xff]
    %v113 = vld [vmem:[#allocation5 + $0xb0] sm:$0xff]
    %v114 = vld [vmem:[#allocation5 + $0xb8] sm:$0xff]
    %v115 = vld [vmem:[#allocation5 + $0xc0] sm:$0xff]
    %v116 = vld [vmem:[#allocation5 + $0xc8] sm:$0xff]
    %v117 = vld [vmem:[#allocation5 + $0xd0] sm:$0xff]
    %v118 = vld [vmem:[#allocation5 + $0xd8] sm:$0xff]
    %v119 = vld [vmem:[#allocation5 + $0xe0] sm:$0xff]
    %v120 = vld [vmem:[#allocation5 + $0xe8] sm:$0xff]
    %v121 = vld [vmem:[#allocation5 + $0xf0] sm:$0xff]
    %v122 = vld [vmem:[#allocation5 + $0xf8] sm:$0xff]
    %v123 = vld [vmem:[#allocation5 + $0x100] sm:$0xff]
    %v124 = vld [vmem:[#allocation5 + $0x108] sm:$0xff]
    %v125 = vld [vmem:[#allocation5 + $0x110] sm:$0xff]
    %v126 = vld [vmem:[#allocation5 + $0x118] sm:$0xff]
    %v127 = vld [vmem:[#allocation5 + $0x120] sm:$0xff]
    %v128 = vld [vmem:[#allocation5 + $0x128] sm:$0xff]
    %v129 = vld [vmem:[#allocation5 + $0x130] sm:$0xff]
    %v130 = vld [vmem:[#allocation5 + $0x138] sm:$0xff]
    %v131 = vld [vmem:[#allocation5 + $0x140] sm:$0xff]
    %v132 = vld [vmem:[#allocation5 + $0x148] sm:$0xff]
    %v133 = vld [vmem:[#allocation5 + $0x150] sm:$0xff]
    %v134 = vld [vmem:[#allocation5 + $0x158] sm:$0xff]
    %v135 = vld [vmem:[#allocation5 + $0x160] sm:$0xff]
    %v136 = vld [vmem:[#allocation5 + $0x168] sm:$0xff]
    %v137 = vld [vmem:[#allocation5 + $0x170] sm:$0xff]
    %v138 = vld [vmem:[#allocation5 + $0x178] sm:$0xff]
    %v139 = vld [vmem:[#allocation5 + $0x180] sm:$0xff]
    %v140 = vld [vmem:[#allocation5 + $0x188] sm:$0xff]
    %v141 = vld [vmem:[#allocation5 + $0x190] sm:$0xff]
    %v142 = vld [vmem:[#allocation5 + $0x198] sm:$0xff]
    %v143 = vld [vmem:[#allocation5 + $0x1a0] sm:$0xff]
    %v144 = vld [vmem:[#allocation5 + $0x1a8] sm:$0xff]
    %v145 = vld [vmem:[#allocation5 + $0x1b0] sm:$0xff]
    %v146 = vld [vmem:[#allocation5 + $0x1b8] sm:$0xff]
    %v147 = vld [vmem:[#allocation5 + $0x1c0] sm:$0xff]
    %v148 = vld [vmem:[#allocation5 + $0x1c8] sm:$0xff]
    %v149 = vld [vmem:[#allocation5 + $0x1d0] sm:$0xff]
    %v150 = vld [vmem:[#allocation5 + $0x1d8] sm:$0xff]
    %v151 = vld [vmem:[#allocation5 + $0x1e0] sm:$0xff]
    %v152 = vld [vmem:[#allocation5 + $0x1e8] sm:$0xff]
    %v153 = vld [vmem:[#allocation5 + $0x1f0] sm:$0xff]
    %v154 = vld [vmem:[#allocation5 + $0x1f8] sm:$0xff]
    %v155 = vld [vmem:[#allocation5 + $0x200] sm:$0xff]
    %v156 = vld [vmem:[#allocation5 + $0x208] sm:$0xff]
    %v157 = vld [vmem:[#allocation5 + $0x210] sm:$0xff]
    %v158 = vld [vmem:[#allocation5 + $0x218] sm:$0xff]
    %v159 = vld [vmem:[#allocation5 + $0x220] sm:$0xff]
    %v160 = vld [vmem:[#allocation5 + $0x228] sm:$0xff]
    %v161 = vld [vmem:[#allocation5 + $0x230] sm:$0xff]
    %v162 = vld [vmem:[#allocation5 + $0x238] sm:$0xff]
    %v163 = vld [vmem:[#allocation5 + $0x240] sm:$0xff]
    %v164 = vld [vmem:[#allocation5 + $0x248] sm:$0xff]
    %v165 = vld [vmem:[#allocation5 + $0x250] sm:$0xff]
    %v166 = vld [vmem:[#allocation5 + $0x258] sm:$0xff]
    %v167 = vld [vmem:[#allocation5 + $0x260] sm:$0xff]
    %v168 = vld [vmem:[#allocation5 + $0x268] sm:$0xff]
    %v169 = vld [vmem:[#allocation5 + $0x270] sm:$0xff]
    %v170 = vld [vmem:[#allocation5 + $0x278] sm:$0xff]
    %v171 = vld [vmem:[#allocation5 + $0x280] sm:$0xff]
    %v172 = vld [vmem:[#allocation5 + $0x288] sm:$0xff]
    %v173 = vld [vmem:[#allocation5 + $0x290] sm:$0xff]
    %v174 = vld [vmem:[#allocation5 + $0x298] sm:$0xff]
    %v175 = vld [vmem:[#allocation5 + $0x2a0] sm:$0xff]
    %v176 = vld [vmem:[#allocation5 + $0x2a8] sm:$0xff]
    %v177 = vld [vmem:[#allocation5 + $0x2b0] sm:$0xff]
    %v178 = vld [vmem:[#allocation5 + $0x2b8] sm:$0xff]
    %v179 = vld [vmem:[#allocation5 + $0x2c0] sm:$0xff]
    %v180 = vld [vmem:[#allocation5 + $0x2c8] sm:$0xff]
    %v181 = vld [vmem:[#allocation5 + $0x2d0] sm:$0xff]
    %v182 = vld [vmem:[#allocation5 + $0x2d8] sm:$0xff]
    %v183 = vld [vmem:[#allocation5 + $0x2e0] sm:$0xff]
    %v184 = vld [vmem:[#allocation5 + $0x2e8] sm:$0xff]
    %v185 = vld [vmem:[#allocation5 + $0x2f0] sm:$0xff]
    %v186 = vld [vmem:[#allocation5 + $0x2f8] sm:$0xff]
    %v187 = vld [vmem:[#allocation5 + $0x300] sm:$0xff]
    %v188 = vld [vmem:[#allocation5 + $0x308] sm:$0xff]
    %v189 = vld [vmem:[#allocation5 + $0x310] sm:$0xff]
    %v190 = vld [vmem:[#allocation5 + $0x318] sm:$0xff]
    %v191 = vld [vmem:[#allocation5 + $0x320] sm:$0xff]
    %v192 = vld [vmem:[#allocation5 + $0x328] sm:$0xff]
    %v193 = vld [vmem:[#allocation5 + $0x330] sm:$0xff]
    %v194 = vld [vmem:[#allocation5 + $0x338] sm:$0xff]
    %v195 = vld [vmem:[#allocation5 + $0x340] sm:$0xff]
    %v196 = vld [vmem:[#allocation5 + $0x348] sm:$0xff]
    %v197 = vld [vmem:[#allocation5 + $0x350] sm:$0xff]
    %v198 = vld [vmem:[#allocation5 + $0x358] sm:$0xff]
    %v199 = vld [vmem:[#allocation5 + $0x360] sm:$0xff]
    %v200 = vld [vmem:[#allocation5 + $0x368] sm:$0xff]
    %v201 = vld [vmem:[#allocation5 + $0x370] sm:$0xff]
    %v202 = vld [vmem:[#allocation5 + $0x378] sm:$0xff]
    %v203 = vld [vmem:[#allocation5 + $0x380] sm:$0xff]
    %v204 = vld [vmem:[#allocation5 + $0x388] sm:$0xff]
    %v205 = vld [vmem:[#allocation5 + $0x390] sm:$0xff]
    %v206 = vld [vmem:[#allocation5 + $0x398] sm:$0xff]
    %v207 = vld [vmem:[#allocation5 + $0x3a0] sm:$0xff]
    %v208 = vld [vmem:[#allocation5 + $0x3a8] sm:$0xff]
    %v209 = vld [vmem:[#allocation5 + $0x3b0] sm:$0xff]
    %v210 = vld [vmem:[#allocation5 + $0x3b8] sm:$0xff]
    %v211 = vld [vmem:[#allocation5 + $0x3c0] sm:$0xff]
    %v212 = vld [vmem:[#allocation5 + $0x3c8] sm:$0xff]
    %v213 = vld [vmem:[#allocation5 + $0x3d0] sm:$0xff]
    %v214 = vld [vmem:[#allocation5 + $0x3d8] sm:$0xff]
    %v215 = vld [vmem:[#allocation5 + $0x3e0] sm:$0xff]
    %v216 = vld [vmem:[#allocation5 + $0x3e8] sm:$0xff]
    %v217 = vld [vmem:[#allocation5 + $0x3f0] sm:$0xff]
    %v218 = vld [vmem:[#allocation5 + $0x3f8] sm:$0xff]
    %v219 = vld [vmem:[%s2] sm:$0x3]
    %v221 = vlaneseq
    %v222 = vshrl.u32 %v221, 7
    %v223 = vsub.s32 0, %v222
    %v224 = vrot.slane %v219, %v223
    %v225 = vlaneseq
    %v226 = vshrl.u32 %v225, 7
    %v227 = vsub.s32 1, %v226
    %v228 = vrot.slane %v219, %v227
    %v239 = vunpack.c.l.b16 %v83
    %v240 = vunpack.c.h.b16 %v83
    %v241 = vunpack.c.l.b16 %v84
    %v242 = vunpack.c.h.b16 %v84
    %v243 = vunpack.c.l.b16 %v85
    %v244 = vunpack.c.h.b16 %v85
    %v245 = vunpack.c.l.b16 %v86
    %v246 = vunpack.c.h.b16 %v86
    %v247 = vunpack.c.l.b16 %v87
    %v248 = vunpack.c.h.b16 %v87
    %v249 = vunpack.c.l.b16 %v88
    %v250 = vunpack.c.h.b16 %v88
    %v251 = vunpack.c.l.b16 %v89
    %v252 = vunpack.c.h.b16 %v89
    %v253 = vunpack.c.l.b16 %v90
    %v254 = vunpack.c.h.b16 %v90
    %v255 = vpack.c.b16 %v247, %v239
    %v256 = vpack.c.b16 %v248, %v240
    %v257 = vpack.c.b16 %v249, %v241
    %v258 = vpack.c.b16 %v250, %v242
    %v259 = vpack.c.b16 %v251, %v243
    %v260 = vpack.c.b16 %v252, %v244
    %v261 = vpack.c.b16 %v253, %v245
    %v262 = vpack.c.b16 %v254, %v246
    %v399 = vunpack.c.l.b16 %v91
    %v400 = vunpack.c.h.b16 %v91
    %v401 = vunpack.c.l.b16 %v92
    %v402 = vunpack.c.h.b16 %v92
    %v403 = vunpack.c.l.b16 %v93
    %v404 = vunpack.c.h.b16 %v93
    %v405 = vunpack.c.l.b16 %v94
    %v406 = vunpack.c.h.b16 %v94
    %v407 = vunpack.c.l.b16 %v95
    %v408 = vunpack.c.h.b16 %v95
    %v409 = vunpack.c.l.b16 %v96
    %v410 = vunpack.c.h.b16 %v96
    %v411 = vunpack.c.l.b16 %v97
    %v412 = vunpack.c.h.b16 %v97
    %v413 = vunpack.c.l.b16 %v98
    %v414 = vunpack.c.h.b16 %v98
    %v415 = vunpack.c.l.b16 %v99
    %v416 = vunpack.c.h.b16 %v99
    %v417 = vunpack.c.l.b16 %v100
    %v418 = vunpack.c.h.b16 %v100
    %v419 = vunpack.c.l.b16 %v101
    %v420 = vunpack.c.h.b16 %v101
    %v421 = vunpack.c.l.b16 %v102
    %v422 = vunpack.c.h.b16 %v102
    %v423 = vunpack.c.l.b16 %v103
    %v424 = vunpack.c.h.b16 %v103
    %v425 = vunpack.c.l.b16 %v104
    %v426 = vunpack.c.h.b16 %v104
    %v427 = vunpack.c.l.b16 %v105
    %v428 = vunpack.c.h.b16 %v105
    %v429 = vunpack.c.l.b16 %v106
    %v430 = vunpack.c.h.b16 %v106
    %v431 = vunpack.c.l.b16 %v107
    %v432 = vunpack.c.h.b16 %v107
    %v433 = vunpack.c.l.b16 %v108
    %v434 = vunpack.c.h.b16 %v108
    %v435 = vunpack.c.l.b16 %v109
    %v436 = vunpack.c.h.b16 %v109
    %v437 = vunpack.c.l.b16 %v110
    %v438 = vunpack.c.h.b16 %v110
    %v439 = vunpack.c.l.b16 %v111
    %v440 = vunpack.c.h.b16 %v111
    %v441 = vunpack.c.l.b16 %v112
    %v442 = vunpack.c.h.b16 %v112
    %v443 = vunpack.c.l.b16 %v113
    %v444 = vunpack.c.h.b16 %v113
    %v445 = vunpack.c.l.b16 %v114
    %v446 = vunpack.c.h.b16 %v114
    %v447 = vunpack.c.l.b16 %v115
    %v448 = vunpack.c.h.b16 %v115
    %v449 = vunpack.c.l.b16 %v116
    %v450 = vunpack.c.h.b16 %v116
    %v451 = vunpack.c.l.b16 %v117
    %v452 = vunpack.c.h.b16 %v117
    %v453 = vunpack.c.l.b16 %v118
    %v454 = vunpack.c.h.b16 %v118
    %v455 = vunpack.c.l.b16 %v119
    %v456 = vunpack.c.h.b16 %v119
    %v457 = vunpack.c.l.b16 %v120
    %v458 = vunpack.c.h.b16 %v120
    %v459 = vunpack.c.l.b16 %v121
    %v460 = vunpack.c.h.b16 %v121
    %v461 = vunpack.c.l.b16 %v122
    %v462 = vunpack.c.h.b16 %v122
    %v463 = vunpack.c.l.b16 %v123
    %v464 = vunpack.c.h.b16 %v123
    %v465 = vunpack.c.l.b16 %v124
    %v466 = vunpack.c.h.b16 %v124
    %v467 = vunpack.c.l.b16 %v125
    %v468 = vunpack.c.h.b16 %v125
    %v469 = vunpack.c.l.b16 %v126
    %v470 = vunpack.c.h.b16 %v126
    %v471 = vunpack.c.l.b16 %v127
    %v472 = vunpack.c.h.b16 %v127
    %v473 = vunpack.c.l.b16 %v128
    %v474 = vunpack.c.h.b16 %v128
    %v475 = vunpack.c.l.b16 %v129
    %v476 = vunpack.c.h.b16 %v129
    %v477 = vunpack.c.l.b16 %v130
    %v478 = vunpack.c.h.b16 %v130
    %v479 = vunpack.c.l.b16 %v131
    %v480 = vunpack.c.h.b16 %v131
    %v481 = vunpack.c.l.b16 %v132
    %v482 = vunpack.c.h.b16 %v132
    %v483 = vunpack.c.l.b16 %v133
    %v484 = vunpack.c.h.b16 %v133
    %v485 = vunpack.c.l.b16 %v134
    %v486 = vunpack.c.h.b16 %v134
    %v487 = vunpack.c.l.b16 %v135
    %v488 = vunpack.c.h.b16 %v135
    %v489 = vunpack.c.l.b16 %v136
    %v490 = vunpack.c.h.b16 %v136
    %v491 = vunpack.c.l.b16 %v137
    %v492 = vunpack.c.h.b16 %v137
    %v493 = vunpack.c.l.b16 %v138
    %v494 = vunpack.c.h.b16 %v138
    %v495 = vunpack.c.l.b16 %v139
    %v496 = vunpack.c.h.b16 %v139
    %v497 = vunpack.c.l.b16 %v140
    %v498 = vunpack.c.h.b16 %v140
    %v499 = vunpack.c.l.b16 %v141
    %v500 = vunpack.c.h.b16 %v141
    %v501 = vunpack.c.l.b16 %v142
    %v502 = vunpack.c.h.b16 %v142
    %v503 = vunpack.c.l.b16 %v143
    %v504 = vunpack.c.h.b16 %v143
    %v505 = vunpack.c.l.b16 %v144
    %v506 = vunpack.c.h.b16 %v144
    %v507 = vunpack.c.l.b16 %v145
    %v508 = vunpack.c.h.b16 %v145
    %v509 = vunpack.c.l.b16 %v146
    %v510 = vunpack.c.h.b16 %v146
    %v511 = vunpack.c.l.b16 %v147
    %v512 = vunpack.c.h.b16 %v147
    %v513 = vunpack.c.l.b16 %v148
    %v514 = vunpack.c.h.b16 %v148
    %v515 = vunpack.c.l.b16 %v149
    %v516 = vunpack.c.h.b16 %v149
    %v517 = vunpack.c.l.b16 %v150
    %v518 = vunpack.c.h.b16 %v150
    %v519 = vunpack.c.l.b16 %v151
    %v520 = vunpack.c.h.b16 %v151
    %v521 = vunpack.c.l.b16 %v152
    %v522 = vunpack.c.h.b16 %v152
    %v523 = vunpack.c.l.b16 %v153
    %v524 = vunpack.c.h.b16 %v153
    %v525 = vunpack.c.l.b16 %v154
    %v526 = vunpack.c.h.b16 %v154
    %v527 = vunpack.c.l.b16 %v155
    %v528 = vunpack.c.h.b16 %v155
    %v529 = vunpack.c.l.b16 %v156
    %v530 = vunpack.c.h.b16 %v156
    %v531 = vunpack.c.l.b16 %v157
    %v532 = vunpack.c.h.b16 %v157
    %v533 = vunpack.c.l.b16 %v158
    %v534 = vunpack.c.h.b16 %v158
    %v535 = vunpack.c.l.b16 %v159
    %v536 = vunpack.c.h.b16 %v159
    %v537 = vunpack.c.l.b16 %v160
    %v538 = vunpack.c.h.b16 %v160
    %v539 = vunpack.c.l.b16 %v161
    %v540 = vunpack.c.h.b16 %v161
    %v541 = vunpack.c.l.b16 %v162
    %v542 = vunpack.c.h.b16 %v162
    %v543 = vunpack.c.l.b16 %v163
    %v544 = vunpack.c.h.b16 %v163
    %v545 = vunpack.c.l.b16 %v164
    %v546 = vunpack.c.h.b16 %v164
    %v547 = vunpack.c.l.b16 %v165
    %v548 = vunpack.c.h.b16 %v165
    %v549 = vunpack.c.l.b16 %v166
    %v550 = vunpack.c.h.b16 %v166
    %v551 = vunpack.c.l.b16 %v167
    %v552 = vunpack.c.h.b16 %v167
    %v553 = vunpack.c.l.b16 %v168
    %v554 = vunpack.c.h.b16 %v168
    %v555 = vunpack.c.l.b16 %v169
    %v556 = vunpack.c.h.b16 %v169
    %v557 = vunpack.c.l.b16 %v170
    %v558 = vunpack.c.h.b16 %v170
    %v559 = vunpack.c.l.b16 %v171
    %v560 = vunpack.c.h.b16 %v171
    %v561 = vunpack.c.l.b16 %v172
    %v562 = vunpack.c.h.b16 %v172
    %v563 = vunpack.c.l.b16 %v173
    %v564 = vunpack.c.h.b16 %v173
    %v565 = vunpack.c.l.b16 %v174
    %v566 = vunpack.c.h.b16 %v174
    %v567 = vunpack.c.l.b16 %v175
    %v568 = vunpack.c.h.b16 %v175
    %v569 = vunpack.c.l.b16 %v176
    %v570 = vunpack.c.h.b16 %v176
    %v571 = vunpack.c.l.b16 %v177
    %v572 = vunpack.c.h.b16 %v177
    %v573 = vunpack.c.l.b16 %v178
    %v574 = vunpack.c.h.b16 %v178
    %v575 = vunpack.c.l.b16 %v179
    %v576 = vunpack.c.h.b16 %v179
    %v577 = vunpack.c.l.b16 %v180
    %v578 = vunpack.c.h.b16 %v180
    %v579 = vunpack.c.l.b16 %v181
    %v580 = vunpack.c.h.b16 %v181
    %v581 = vunpack.c.l.b16 %v182
    %v582 = vunpack.c.h.b16 %v182
    %v583 = vunpack.c.l.b16 %v183
    %v584 = vunpack.c.h.b16 %v183
    %v585 = vunpack.c.l.b16 %v184
    %v586 = vunpack.c.h.b16 %v184
    %v587 = vunpack.c.l.b16 %v185
    %v588 = vunpack.c.h.b16 %v185
    %v589 = vunpack.c.l.b16 %v186
    %v590 = vunpack.c.h.b16 %v186
    %v591 = vunpack.c.l.b16 %v187
    %v592 = vunpack.c.h.b16 %v187
    %v593 = vunpack.c.l.b16 %v188
    %v594 = vunpack.c.h.b16 %v188
    %v595 = vunpack.c.l.b16 %v189
    %v596 = vunpack.c.h.b16 %v189
    %v597 = vunpack.c.l.b16 %v190
    %v598 = vunpack.c.h.b16 %v190
    %v599 = vunpack.c.l.b16 %v191
    %v600 = vunpack.c.h.b16 %v191
    %v601 = vunpack.c.l.b16 %v192
    %v602 = vunpack.c.h.b16 %v192
    %v603 = vunpack.c.l.b16 %v193
    %v604 = vunpack.c.h.b16 %v193
    %v605 = vunpack.c.l.b16 %v194
    %v606 = vunpack.c.h.b16 %v194
    %v607 = vunpack.c.l.b16 %v195
    %v608 = vunpack.c.h.b16 %v195
    %v609 = vunpack.c.l.b16 %v196
    %v610 = vunpack.c.h.b16 %v196
    %v611 = vunpack.c.l.b16 %v197
    %v612 = vunpack.c.h.b16 %v197
    %v613 = vunpack.c.l.b16 %v198
    %v614 = vunpack.c.h.b16 %v198
    %v615 = vunpack.c.l.b16 %v199
    %v616 = vunpack.c.h.b16 %v199
    %v617 = vunpack.c.l.b16 %v200
    %v618 = vunpack.c.h.b16 %v200
    %v619 = vunpack.c.l.b16 %v201
    %v620 = vunpack.c.h.b16 %v201
    %v621 = vunpack.c.l.b16 %v202
    %v622 = vunpack.c.h.b16 %v202
    %v623 = vunpack.c.l.b16 %v203
    %v624 = vunpack.c.h.b16 %v203
    %v625 = vunpack.c.l.b16 %v204
    %v626 = vunpack.c.h.b16 %v204
    %v627 = vunpack.c.l.b16 %v205
    %v628 = vunpack.c.h.b16 %v205
    %v629 = vunpack.c.l.b16 %v206
    %v630 = vunpack.c.h.b16 %v206
    %v631 = vunpack.c.l.b16 %v207
    %v632 = vunpack.c.h.b16 %v207
    %v633 = vunpack.c.l.b16 %v208
    %v634 = vunpack.c.h.b16 %v208
    %v635 = vunpack.c.l.b16 %v209
    %v636 = vunpack.c.h.b16 %v209
    %v637 = vunpack.c.l.b16 %v210
    %v638 = vunpack.c.h.b16 %v210
    %v639 = vunpack.c.l.b16 %v211
    %v640 = vunpack.c.h.b16 %v211
    %v641 = vunpack.c.l.b16 %v212
    %v642 = vunpack.c.h.b16 %v212
    %v643 = vunpack.c.l.b16 %v213
    %v644 = vunpack.c.h.b16 %v213
    %v645 = vunpack.c.l.b16 %v214
    %v646 = vunpack.c.h.b16 %v214
    %v647 = vunpack.c.l.b16 %v215
    %v648 = vunpack.c.h.b16 %v215
    %v649 = vunpack.c.l.b16 %v216
    %v650 = vunpack.c.h.b16 %v216
    %v651 = vunpack.c.l.b16 %v217
    %v652 = vunpack.c.h.b16 %v217
    %v653 = vunpack.c.l.b16 %v218
    %v654 = vunpack.c.h.b16 %v218
    %v655 = vpack.c.b16 %v401, %v399
    %v656 = vpack.c.b16 %v402, %v400
    %v657 = vpack.c.b16 %v405, %v403
    %v658 = vpack.c.b16 %v406, %v404
    %v659 = vpack.c.b16 %v409, %v407
    %v660 = vpack.c.b16 %v410, %v408
    %v661 = vpack.c.b16 %v413, %v411
    %v662 = vpack.c.b16 %v414, %v412
    %v663 = vpack.c.b16 %v417, %v415
    %v664 = vpack.c.b16 %v418, %v416
    %v665 = vpack.c.b16 %v421, %v419
    %v666 = vpack.c.b16 %v422, %v420
    %v667 = vpack.c.b16 %v425, %v423
    %v668 = vpack.c.b16 %v426, %v424
    %v669 = vpack.c.b16 %v429, %v427
    %v670 = vpack.c.b16 %v430, %v428
    %v671 = vpack.c.b16 %v433, %v431
    %v672 = vpack.c.b16 %v434, %v432
    %v673 = vpack.c.b16 %v437, %v435
    %v674 = vpack.c.b16 %v438, %v436
    %v675 = vpack.c.b16 %v441, %v439
    %v676 = vpack.c.b16 %v442, %v440
    %v677 = vpack.c.b16 %v445, %v443
    %v678 = vpack.c.b16 %v446, %v444
    %v679 = vpack.c.b16 %v449, %v447
    %v680 = vpack.c.b16 %v450, %v448
    %v681 = vpack.c.b16 %v453, %v451
    %v682 = vpack.c.b16 %v454, %v452
    %v683 = vpack.c.b16 %v457, %v455
    %v684 = vpack.c.b16 %v458, %v456
    %v685 = vpack.c.b16 %v461, %v459
    %v686 = vpack.c.b16 %v462, %v460
    %v687 = vpack.c.b16 %v465, %v463
    %v688 = vpack.c.b16 %v466, %v464
    %v689 = vpack.c.b16 %v469, %v467
    %v690 = vpack.c.b16 %v470, %v468
    %v691 = vpack.c.b16 %v473, %v471
    %v692 = vpack.c.b16 %v474, %v472
    %v693 = vpack.c.b16 %v477, %v475
    %v694 = vpack.c.b16 %v478, %v476
    %v695 = vpack.c.b16 %v481, %v479
    %v696 = vpack.c.b16 %v482, %v480
    %v697 = vpack.c.b16 %v485, %v483
    %v698 = vpack.c.b16 %v486, %v484
    %v699 = vpack.c.b16 %v489, %v487
    %v700 = vpack.c.b16 %v490, %v488
    %v701 = vpack.c.b16 %v493, %v491
    %v702 = vpack.c.b16 %v494, %v492
    %v703 = vpack.c.b16 %v497, %v495
    %v704 = vpack.c.b16 %v498, %v496
    %v705 = vpack.c.b16 %v501, %v499
    %v706 = vpack.c.b16 %v502, %v500
    %v707 = vpack.c.b16 %v505, %v503
    %v708 = vpack.c.b16 %v506, %v504
    %v709 = vpack.c.b16 %v509, %v507
    %v710 = vpack.c.b16 %v510, %v508
    %v711 = vpack.c.b16 %v513, %v511
    %v712 = vpack.c.b16 %v514, %v512
    %v713 = vpack.c.b16 %v517, %v515
    %v714 = vpack.c.b16 %v518, %v516
    %v715 = vpack.c.b16 %v521, %v519
    %v716 = vpack.c.b16 %v522, %v520
    %v717 = vpack.c.b16 %v525, %v523
    %v718 = vpack.c.b16 %v526, %v524
    %v719 = vpack.c.b16 %v529, %v527
    %v720 = vpack.c.b16 %v530, %v528
    %v721 = vpack.c.b16 %v533, %v531
    %v722 = vpack.c.b16 %v534, %v532
    %v723 = vpack.c.b16 %v537, %v535
    %v724 = vpack.c.b16 %v538, %v536
    %v725 = vpack.c.b16 %v541, %v539
    %v726 = vpack.c.b16 %v542, %v540
    %v727 = vpack.c.b16 %v545, %v543
    %v728 = vpack.c.b16 %v546, %v544
    %v729 = vpack.c.b16 %v549, %v547
    %v730 = vpack.c.b16 %v550, %v548
    %v731 = vpack.c.b16 %v553, %v551
    %v732 = vpack.c.b16 %v554, %v552
    %v733 = vpack.c.b16 %v557, %v555
    %v734 = vpack.c.b16 %v558, %v556
    %v735 = vpack.c.b16 %v561, %v559
    %v736 = vpack.c.b16 %v562, %v560
    %v737 = vpack.c.b16 %v565, %v563
    %v738 = vpack.c.b16 %v566, %v564
    %v739 = vpack.c.b16 %v569, %v567
    %v740 = vpack.c.b16 %v570, %v568
    %v741 = vpack.c.b16 %v573, %v571
    %v742 = vpack.c.b16 %v574, %v572
    %v743 = vpack.c.b16 %v577, %v575
    %v744 = vpack.c.b16 %v578, %v576
    %v745 = vpack.c.b16 %v581, %v579
    %v746 = vpack.c.b16 %v582, %v580
    %v747 = vpack.c.b16 %v585, %v583
    %v748 = vpack.c.b16 %v586, %v584
    %v749 = vpack.c.b16 %v589, %v587
    %v750 = vpack.c.b16 %v590, %v588
    %v751 = vpack.c.b16 %v593, %v591
    %v752 = vpack.c.b16 %v594, %v592
    %v753 = vpack.c.b16 %v597, %v595
    %v754 = vpack.c.b16 %v598, %v596
    %v755 = vpack.c.b16 %v601, %v599
    %v756 = vpack.c.b16 %v602, %v600
    %v757 = vpack.c.b16 %v605, %v603
    %v758 = vpack.c.b16 %v606, %v604
    %v759 = vpack.c.b16 %v609, %v607
    %v760 = vpack.c.b16 %v610, %v608
    %v761 = vpack.c.b16 %v613, %v611
    %v762 = vpack.c.b16 %v614, %v612
    %v763 = vpack.c.b16 %v617, %v615
    %v764 = vpack.c.b16 %v618, %v616
    %v765 = vpack.c.b16 %v621, %v619
    %v766 = vpack.c.b16 %v622, %v620
    %v767 = vpack.c.b16 %v625, %v623
    %v768 = vpack.c.b16 %v626, %v624
    %v769 = vpack.c.b16 %v629, %v627
    %v770 = vpack.c.b16 %v630, %v628
    %v771 = vpack.c.b16 %v633, %v631
    %v772 = vpack.c.b16 %v634, %v632
    %v773 = vpack.c.b16 %v637, %v635
    %v774 = vpack.c.b16 %v638, %v636
    %v775 = vpack.c.b16 %v641, %v639
    %v776 = vpack.c.b16 %v642, %v640
    %v777 = vpack.c.b16 %v645, %v643
    %v778 = vpack.c.b16 %v646, %v644
    %v779 = vpack.c.b16 %v649, %v647
    %v780 = vpack.c.b16 %v650, %v648
    %v781 = vpack.c.b16 %v653, %v651
    %v782 = vpack.c.b16 %v654, %v652
    %911 = vmatprep.subr.bf16.mxu0 %v670
    %912 = vmatpush1.bf16.msra.mxu0 %v669
    %913 = vmatprep.subr.bf16.mxu0 %v668
    %914 = vmatpush1.bf16.msra.mxu0 %v667
    %915 = vmatprep.subr.bf16.mxu0 %v666
    %916 = vmatpush1.bf16.msra.mxu0 %v665
    %917 = vmatprep.subr.bf16.mxu0 %v664
    %918 = vmatpush1.bf16.msra.mxu0 %v663
    %919 = vmatprep.subr.bf16.mxu0 %v662
    %920 = vmatpush1.bf16.msra.mxu0 %v661
    %921 = vmatprep.subr.bf16.mxu0 %v660
    %922 = vmatpush1.bf16.msra.mxu0 %v659
    %923 = vmatprep.subr.bf16.mxu0 %v658
    %924 = vmatpush1.bf16.msra.mxu0 %v657
    %925 = vmatprep.subr.bf16.mxu0 %v656
    %926 = vmatpush1.bf16.msra.mxu0 %v655
    %927 = vmatprep.subr.bf16.mxu0 %v686
    %928 = vmatpush2.bf16.msra.mxu0 %v685
    %929 = vmatprep.subr.bf16.mxu0 %v684
    %930 = vmatpush2.bf16.msra.mxu0 %v683
    %931 = vmatprep.subr.bf16.mxu0 %v682
    %932 = vmatpush2.bf16.msra.mxu0 %v681
    %933 = vmatprep.subr.bf16.mxu0 %v680
    %934 = vmatpush2.bf16.msra.mxu0 %v679
    %935 = vmatprep.subr.bf16.mxu0 %v678
    %936 = vmatpush2.bf16.msra.mxu0 %v677
    %937 = vmatprep.subr.bf16.mxu0 %v676
    %938 = vmatpush2.bf16.msra.mxu0 %v675
    %939 = vmatprep.subr.bf16.mxu0 %v674
    %940 = vmatpush2.bf16.msra.mxu0 %v673
    %941 = vmatprep.subr.bf16.mxu0 %v672
    %942 = vmatpush2.bf16.msra.mxu0 %v671
    %943 = vmatprep.mubr.bf16.mxu0 %v256
    %944 = vmatmul.mubr.bf16.gmra.mxu0 %v255
    %v945 = vpop.f32.mrf.mxu0
    %v946 = vadd.f32 %v224, %v945
    %v947 = vpop.f32.mrf.mxu0
    %v948 = vadd.f32 %v228, %v947
    %v949 = vpop.f32.mrf.mxu0
    %v950 = vadd.f32 %v224, %v949
    %v951 = vpop.f32.mrf.mxu0
    %v952 = vadd.f32 %v228, %v951
    %953 = vdwg.mxu0
    %954 = vmatprep.subr.bf16.mxu0 %v702
    %955 = vmatpush1.bf16.msra.mxu0 %v701
    %956 = vmatprep.subr.bf16.mxu0 %v700
    %957 = vmatpush1.bf16.msra.mxu0 %v699
    %958 = vmatprep.subr.bf16.mxu0 %v698
    %959 = vmatpush1.bf16.msra.mxu0 %v697
    %960 = vmatprep.subr.bf16.mxu0 %v696
    %961 = vmatpush1.bf16.msra.mxu0 %v695
    %962 = vmatprep.subr.bf16.mxu0 %v694
    %963 = vmatpush1.bf16.msra.mxu0 %v693
    %964 = vmatprep.subr.bf16.mxu0 %v692
    %965 = vmatpush1.bf16.msra.mxu0 %v691
    %966 = vmatprep.subr.bf16.mxu0 %v690
    %967 = vmatpush1.bf16.msra.mxu0 %v689
    %968 = vmatprep.subr.bf16.mxu0 %v688
    %969 = vmatpush1.bf16.msra.mxu0 %v687
    %970 = vmatprep.subr.bf16.mxu0 %v718
    %971 = vmatpush2.bf16.msra.mxu0 %v717
    %972 = vmatprep.subr.bf16.mxu0 %v716
    %973 = vmatpush2.bf16.msra.mxu0 %v715
    %974 = vmatprep.subr.bf16.mxu0 %v714
    %975 = vmatpush2.bf16.msra.mxu0 %v713
    %976 = vmatprep.subr.bf16.mxu0 %v712
    %977 = vmatpush2.bf16.msra.mxu0 %v711
    %978 = vmatprep.subr.bf16.mxu0 %v710
    %979 = vmatpush2.bf16.msra.mxu0 %v709
    %980 = vmatprep.subr.bf16.mxu0 %v708
    %981 = vmatpush2.bf16.msra.mxu0 %v707
    %982 = vmatprep.subr.bf16.mxu0 %v706
    %983 = vmatpush2.bf16.msra.mxu0 %v705
    %984 = vmatprep.subr.bf16.mxu0 %v704
    %985 = vmatpush2.bf16.msra.mxu0 %v703
    %986 = vmatprep.mubr.bf16.mxu0 %v258
    %987 = vmatmul.mubr.bf16.gmra.mxu0 %v257
    %v988 = vpop.f32.mrf.mxu0
    %v989 = vadd.f32 %v946, %v988
    %v990 = vpop.f32.mrf.mxu0
    %v991 = vadd.f32 %v948, %v990
    %v992 = vpop.f32.mrf.mxu0
    %v993 = vadd.f32 %v950, %v992
    %v994 = vpop.f32.mrf.mxu0
    %v995 = vadd.f32 %v952, %v994
    %996 = vdwg.mxu0
    %997 = vmatprep.subr.bf16.mxu0 %v734
    %998 = vmatpush1.bf16.msra.mxu0 %v733
    %999 = vmatprep.subr.bf16.mxu0 %v732
    %1000 = vmatpush1.bf16.msra.mxu0 %v731
    %1001 = vmatprep.subr.bf16.mxu0 %v730
    %1002 = vmatpush1.bf16.msra.mxu0 %v729
    %1003 = vmatprep.subr.bf16.mxu0 %v728
    %1004 = vmatpush1.bf16.msra.mxu0 %v727
    %1005 = vmatprep.subr.bf16.mxu0 %v726
    %1006 = vmatpush1.bf16.msra.mxu0 %v725
    %1007 = vmatprep.subr.bf16.mxu0 %v724
    %1008 = vmatpush1.bf16.msra.mxu0 %v723
    %1009 = vmatprep.subr.bf16.mxu0 %v722
    %1010 = vmatpush1.bf16.msra.mxu0 %v721
    %1011 = vmatprep.subr.bf16.mxu0 %v720
    %1012 = vmatpush1.bf16.msra.mxu0 %v719
    %1013 = vmatprep.subr.bf16.mxu0 %v750
    %1014 = vmatpush2.bf16.msra.mxu0 %v749
    %1015 = vmatprep.subr.bf16.mxu0 %v748
    %1016 = vmatpush2.bf16.msra.mxu0 %v747
    %1017 = vmatprep.subr.bf16.mxu0 %v746
    %1018 = vmatpush2.bf16.msra.mxu0 %v745
    %1019 = vmatprep.subr.bf16.mxu0 %v744
    %1020 = vmatpush2.bf16.msra.mxu0 %v743
    %1021 = vmatprep.subr.bf16.mxu0 %v742
    %1022 = vmatpush2.bf16.msra.mxu0 %v741
    %1023 = vmatprep.subr.bf16.mxu0 %v740
    %1024 = vmatpush2.bf16.msra.mxu0 %v739
    %1025 = vmatprep.subr.bf16.mxu0 %v738
    %1026 = vmatpush2.bf16.msra.mxu0 %v737
    %1027 = vmatprep.subr.bf16.mxu0 %v736
    %1028 = vmatpush2.bf16.msra.mxu0 %v735
    %1029 = vmatprep.mubr.bf16.mxu0 %v260
    %1030 = vmatmul.mubr.bf16.gmra.mxu0 %v259
    %v1031 = vpop.f32.mrf.mxu0
    %v1032 = vadd.f32 %v989, %v1031
    %v1033 = vpop.f32.mrf.mxu0
    %v1034 = vadd.f32 %v991, %v1033
    %v1035 = vpop.f32.mrf.mxu0
    %v1036 = vadd.f32 %v993, %v1035
    %v1037 = vpop.f32.mrf.mxu0
    %v1038 = vadd.f32 %v995, %v1037
    %1039 = vdwg.mxu0
    %1040 = vmatprep.subr.bf16.mxu0 %v766
    %1041 = vmatpush1.bf16.msra.mxu0 %v765
    %1042 = vmatprep.subr.bf16.mxu0 %v764
    %1043 = vmatpush1.bf16.msra.mxu0 %v763
    %1044 = vmatprep.subr.bf16.mxu0 %v762
    %1045 = vmatpush1.bf16.msra.mxu0 %v761
    %1046 = vmatprep.subr.bf16.mxu0 %v760
    %1047 = vmatpush1.bf16.msra.mxu0 %v759
    %1048 = vmatprep.subr.bf16.mxu0 %v758
    %1049 = vmatpush1.bf16.msra.mxu0 %v757
    %1050 = vmatprep.subr.bf16.mxu0 %v756
    %1051 = vmatpush1.bf16.msra.mxu0 %v755
    %1052 = vmatprep.subr.bf16.mxu0 %v754
    %1053 = vmatpush1.bf16.msra.mxu0 %v753
    %1054 = vmatprep.subr.bf16.mxu0 %v752
    %1055 = vmatpush1.bf16.msra.mxu0 %v751
    %1056 = vmatprep.subr.bf16.mxu0 %v782
    %1057 = vmatpush2.bf16.msra.mxu0 %v781
    %1058 = vmatprep.subr.bf16.mxu0 %v780
    %1059 = vmatpush2.bf16.msra.mxu0 %v779
    %1060 = vmatprep.subr.bf16.mxu0 %v778
    %1061 = vmatpush2.bf16.msra.mxu0 %v777
    %1062 = vmatprep.subr.bf16.mxu0 %v776
    %1063 = vmatpush2.bf16.msra.mxu0 %v775
    %1064 = vmatprep.subr.bf16.mxu0 %v774
    %1065 = vmatpush2.bf16.msra.mxu0 %v773
    %1066 = vmatprep.subr.bf16.mxu0 %v772
    %1067 = vmatpush2.bf16.msra.mxu0 %v771
    %1068 = vmatprep.subr.bf16.mxu0 %v770
    %1069 = vmatpush2.bf16.msra.mxu0 %v769
    %1070 = vmatprep.subr.bf16.mxu0 %v768
    %1071 = vmatpush2.bf16.msra.mxu0 %v767
    %1072 = vmatprep.mubr.bf16.mxu0 %v262
    %1073 = vmatmul.mubr.bf16.gmra.mxu0 %v261
    %v1074 = vpop.f32.mrf.mxu0
    %v1075 = vadd.f32 %v1032, %v1074
    %v1076 = vpop.f32.mrf.mxu0
    %v1077 = vadd.f32 %v1034, %v1076
    %v1078 = vpop.f32.mrf.mxu0
    %v1079 = vadd.f32 %v1036, %v1078
    %v1080 = vpop.f32.mrf.mxu0
    %v1081 = vadd.f32 %v1038, %v1080
    %1082 = vdwg.mxu0
    %v1083 = vmax.f32 %v1075, 0.0
    %v1084 = vmax.f32 %v1077, 0.0
    %v1085 = vmax.f32 %v1079, 0.0
    %v1086 = vmax.f32 %v1081, 0.0
    %v1087 = vpack.c.bf16 %v1085, %v1083
    %v1088 = vpack.c.bf16 %v1086, %v1084
    %v1089 = vld [vmem:[#allocation7] sm:$0xff]
    %v1090 = vld [vmem:[#allocation7 + $0x8] sm:$0xff]
    %v1091 = vld [vmem:[#allocation7 + $0x10] sm:$0xff]
    %v1092 = vld [vmem:[#allocation7 + $0x18] sm:$0xff]
    %v1093 = vld [vmem:[#allocation7 + $0x20] sm:$0xff]
    %v1094 = vld [vmem:[#allocation7 + $0x28] sm:$0xff]
    %v1095 = vld [vmem:[#allocation7 + $0x30] sm:$0xff]
    %v1096 = vld [vmem:[#allocation7 + $0x38] sm:$0xff]
    %v1097 = vld [vmem:[#allocation7 + $0x40] sm:$0xff]
    %v1098 = vld [vmem:[#allocation7 + $0x48] sm:$0xff]
    %v1099 = vld [vmem:[#allocation7 + $0x50] sm:$0xff]
    %v1100 = vld [vmem:[#allocation7 + $0x58] sm:$0xff]
    %v1101 = vld [vmem:[#allocation7 + $0x60] sm:$0xff]
    %v1102 = vld [vmem:[#allocation7 + $0x68] sm:$0xff]
    %v1103 = vld [vmem:[#allocation7 + $0x70] sm:$0xff]
    %v1104 = vld [vmem:[#allocation7 + $0x78] sm:$0xff]
    %v1105 = vld [vmem:[#allocation7 + $0x80] sm:$0xff]
    %v1106 = vld [vmem:[#allocation7 + $0x88] sm:$0xff]
    %v1107 = vld [vmem:[#allocation7 + $0x90] sm:$0xff]
    %v1108 = vld [vmem:[#allocation7 + $0x98] sm:$0xff]
    %v1109 = vld [vmem:[#allocation7 + $0xa0] sm:$0xff]
    %v1110 = vld [vmem:[#allocation7 + $0xa8] sm:$0xff]
    %v1111 = vld [vmem:[#allocation7 + $0xb0] sm:$0xff]
    %v1112 = vld [vmem:[#allocation7 + $0xb8] sm:$0xff]
    %v1113 = vld [vmem:[#allocation7 + $0xc0] sm:$0xff]
    %v1114 = vld [vmem:[#allocation7 + $0xc8] sm:$0xff]
    %v1115 = vld [vmem:[#allocation7 + $0xd0] sm:$0xff]
    %v1116 = vld [vmem:[#allocation7 + $0xd8] sm:$0xff]
    %v1117 = vld [vmem:[#allocation7 + $0xe0] sm:$0xff]
    %v1118 = vld [vmem:[#allocation7 + $0xe8] sm:$0xff]
    %v1119 = vld [vmem:[#allocation7 + $0xf0] sm:$0xff]
    %v1120 = vld [vmem:[#allocation7 + $0xf8] sm:$0xff]
    %v1121 = vld [vmem:[%s4] sm:$0x3]
    %v1123 = vlaneseq
    %v1124 = vshrl.u32 %v1123, 7
    %v1125 = vsub.s32 0, %v1124
    %v1126 = vrot.slane %v1121, %v1125
    %v1127 = vlaneseq
    %v1128 = vshrl.u32 %v1127, 7
    %v1129 = vsub.s32 1, %v1128
    %v1130 = vrot.slane %v1121, %v1129
    %v1165 = vunpack.c.l.b16 %v1089
    %v1166 = vunpack.c.h.b16 %v1089
    %v1167 = vunpack.c.l.b16 %v1090
    %v1168 = vunpack.c.h.b16 %v1090
    %v1169 = vunpack.c.l.b16 %v1091
    %v1170 = vunpack.c.h.b16 %v1091
    %v1171 = vunpack.c.l.b16 %v1092
    %v1172 = vunpack.c.h.b16 %v1092
    %v1173 = vunpack.c.l.b16 %v1093
    %v1174 = vunpack.c.h.b16 %v1093
    %v1175 = vunpack.c.l.b16 %v1094
    %v1176 = vunpack.c.h.b16 %v1094
    %v1177 = vunpack.c.l.b16 %v1095
    %v1178 = vunpack.c.h.b16 %v1095
    %v1179 = vunpack.c.l.b16 %v1096
    %v1180 = vunpack.c.h.b16 %v1096
    %v1181 = vunpack.c.l.b16 %v1097
    %v1182 = vunpack.c.h.b16 %v1097
    %v1183 = vunpack.c.l.b16 %v1098
    %v1184 = vunpack.c.h.b16 %v1098
    %v1185 = vunpack.c.l.b16 %v1099
    %v1186 = vunpack.c.h.b16 %v1099
    %v1187 = vunpack.c.l.b16 %v1100
    %v1188 = vunpack.c.h.b16 %v1100
    %v1189 = vunpack.c.l.b16 %v1101
    %v1190 = vunpack.c.h.b16 %v1101
    %v1191 = vunpack.c.l.b16 %v1102
    %v1192 = vunpack.c.h.b16 %v1102
    %v1193 = vunpack.c.l.b16 %v1103
    %v1194 = vunpack.c.h.b16 %v1103
    %v1195 = vunpack.c.l.b16 %v1104
    %v1196 = vunpack.c.h.b16 %v1104
    %v1197 = vunpack.c.l.b16 %v1105
    %v1198 = vunpack.c.h.b16 %v1105
    %v1199 = vunpack.c.l.b16 %v1106
    %v1200 = vunpack.c.h.b16 %v1106
    %v1201 = vunpack.c.l.b16 %v1107
    %v1202 = vunpack.c.h.b16 %v1107
    %v1203 = vunpack.c.l.b16 %v1108
    %v1204 = vunpack.c.h.b16 %v1108
    %v1205 = vunpack.c.l.b16 %v1109
    %v1206 = vunpack.c.h.b16 %v1109
    %v1207 = vunpack.c.l.b16 %v1110
    %v1208 = vunpack.c.h.b16 %v1110
    %v1209 = vunpack.c.l.b16 %v1111
    %v1210 = vunpack.c.h.b16 %v1111
    %v1211 = vunpack.c.l.b16 %v1112
    %v1212 = vunpack.c.h.b16 %v1112
    %v1213 = vunpack.c.l.b16 %v1113
    %v1214 = vunpack.c.h.b16 %v1113
    %v1215 = vunpack.c.l.b16 %v1114
    %v1216 = vunpack.c.h.b16 %v1114
    %v1217 = vunpack.c.l.b16 %v1115
    %v1218 = vunpack.c.h.b16 %v1115
    %v1219 = vunpack.c.l.b16 %v1116
    %v1220 = vunpack.c.h.b16 %v1116
    %v1221 = vunpack.c.l.b16 %v1117
    %v1222 = vunpack.c.h.b16 %v1117
    %v1223 = vunpack.c.l.b16 %v1118
    %v1224 = vunpack.c.h.b16 %v1118
    %v1225 = vunpack.c.l.b16 %v1119
    %v1226 = vunpack.c.h.b16 %v1119
    %v1227 = vunpack.c.l.b16 %v1120
    %v1228 = vunpack.c.h.b16 %v1120
    %v1229 = vpack.c.b16 %v1167, %v1165
    %v1230 = vpack.c.b16 %v1168, %v1166
    %v1231 = vpack.c.b16 %v1171, %v1169
    %v1232 = vpack.c.b16 %v1172, %v1170
    %v1233 = vpack.c.b16 %v1175, %v1173
    %v1234 = vpack.c.b16 %v1176, %v1174
    %v1235 = vpack.c.b16 %v1179, %v1177
    %v1236 = vpack.c.b16 %v1180, %v1178
    %v1237 = vpack.c.b16 %v1183, %v1181
    %v1238 = vpack.c.b16 %v1184, %v1182
    %v1239 = vpack.c.b16 %v1187, %v1185
    %v1240 = vpack.c.b16 %v1188, %v1186
    %v1241 = vpack.c.b16 %v1191, %v1189
    %v1242 = vpack.c.b16 %v1192, %v1190
    %v1243 = vpack.c.b16 %v1195, %v1193
    %v1244 = vpack.c.b16 %v1196, %v1194
    %v1245 = vpack.c.b16 %v1199, %v1197
    %v1246 = vpack.c.b16 %v1200, %v1198
    %v1247 = vpack.c.b16 %v1203, %v1201
    %v1248 = vpack.c.b16 %v1204, %v1202
    %v1249 = vpack.c.b16 %v1207, %v1205
    %v1250 = vpack.c.b16 %v1208, %v1206
    %v1251 = vpack.c.b16 %v1211, %v1209
    %v1252 = vpack.c.b16 %v1212, %v1210
    %v1253 = vpack.c.b16 %v1215, %v1213
    %v1254 = vpack.c.b16 %v1216, %v1214
    %v1255 = vpack.c.b16 %v1219, %v1217
    %v1256 = vpack.c.b16 %v1220, %v1218
    %v1257 = vpack.c.b16 %v1223, %v1221
    %v1258 = vpack.c.b16 %v1224, %v1222
    %v1259 = vpack.c.b16 %v1227, %v1225
    %v1260 = vpack.c.b16 %v1228, %v1226
    %1293 = vmatprep.subr.bf16.mxu0 %v1244
    %1294 = vmatpush1.bf16.msra.mxu0 %v1243
    %1295 = vmatprep.subr.bf16.mxu0 %v1242
    %1296 = vmatpush1.bf16.msra.mxu0 %v1241
    %1297 = vmatprep.subr.bf16.mxu0 %v1240
    %1298 = vmatpush1.bf16.msra.mxu0 %v1239
    %1299 = vmatprep.subr.bf16.mxu0 %v1238
    %1300 = vmatpush1.bf16.msra.mxu0 %v1237
    %1301 = vmatprep.subr.bf16.mxu0 %v1236
    %1302 = vmatpush1.bf16.msra.mxu0 %v1235
    %1303 = vmatprep.subr.bf16.mxu0 %v1234
    %1304 = vmatpush1.bf16.msra.mxu0 %v1233
    %1305 = vmatprep.subr.bf16.mxu0 %v1232
    %1306 = vmatpush1.bf16.msra.mxu0 %v1231
    %1307 = vmatprep.subr.bf16.mxu0 %v1230
    %1308 = vmatpush1.bf16.msra.mxu0 %v1229
    %1309 = vmatprep.subr.bf16.mxu0 %v1260
    %1310 = vmatpush2.bf16.msra.mxu0 %v1259
    %1311 = vmatprep.subr.bf16.mxu0 %v1258
    %1312 = vmatpush2.bf16.msra.mxu0 %v1257
    %1313 = vmatprep.subr.bf16.mxu0 %v1256
    %1314 = vmatpush2.bf16.msra.mxu0 %v1255
    %1315 = vmatprep.subr.bf16.mxu0 %v1254
    %1316 = vmatpush2.bf16.msra.mxu0 %v1253
    %1317 = vmatprep.subr.bf16.mxu0 %v1252
    %1318 = vmatpush2.bf16.msra.mxu0 %v1251
    %1319 = vmatprep.subr.bf16.mxu0 %v1250
    %1320 = vmatpush2.bf16.msra.mxu0 %v1249
    %1321 = vmatprep.subr.bf16.mxu0 %v1248
    %1322 = vmatpush2.bf16.msra.mxu0 %v1247
    %1323 = vmatprep.subr.bf16.mxu0 %v1246
    %1324 = vmatpush2.bf16.msra.mxu0 %v1245
    %1325 = vmatprep.mubr.bf16.mxu0 %v1088
    %1326 = vmatmul.mubr.bf16.gmra.mxu0 %v1087
    %v1327 = vpop.f32.mrf.mxu0
    %v1328 = vadd.f32 %v1126, %v1327
    %v1329 = vpop.f32.mrf.mxu0
    %v1330 = vadd.f32 %v1130, %v1329
    %v1331 = vpop.f32.mrf.mxu0
    %v1332 = vadd.f32 %v1126, %v1331
    %v1333 = vpop.f32.mrf.mxu0
    %v1334 = vadd.f32 %v1130, %v1333
    %1335 = vdwg.mxu0
    %v1336 = vmax.f32 %v1328, 0.0
    %v1337 = vmax.f32 %v1330, 0.0
    %v1338 = vmax.f32 %v1332, 0.0
    %v1339 = vmax.f32 %v1334, 0.0
    %v1340 = vpack.c.bf16 %v1338, %v1336
    %v1341 = vpack.c.bf16 %v1339, %v1337
    %v1342 = vld [vmem:[#allocation8] sm:$0xf]
    %v1343 = vld [vmem:[#allocation8 + $0x4] sm:$0xf]
    %v1344 = vld [vmem:[#allocation8 + $0x8] sm:$0xf]
    %v1345 = vld [vmem:[#allocation8 + $0xc] sm:$0xf]
    %v1346 = vld [vmem:[#allocation8 + $0x10] sm:$0xf]
    %v1347 = vld [vmem:[#allocation8 + $0x14] sm:$0xf]
    %v1348 = vld [vmem:[#allocation8 + $0x18] sm:$0xf]
    %v1349 = vld [vmem:[#allocation8 + $0x1c] sm:$0xf]
    %v1350 = vld [vmem:[#allocation8 + $0x20] sm:$0xf]
    %v1351 = vld [vmem:[#allocation8 + $0x24] sm:$0xf]
    %v1352 = vld [vmem:[#allocation8 + $0x28] sm:$0xf]
    %v1353 = vld [vmem:[#allocation8 + $0x2c] sm:$0xf]
    %v1354 = vld [vmem:[#allocation8 + $0x30] sm:$0xf]
    %v1355 = vld [vmem:[#allocation8 + $0x34] sm:$0xf]
    %v1356 = vld [vmem:[#allocation8 + $0x38] sm:$0xf]
    %v1357 = vld [vmem:[#allocation8 + $0x3c] sm:$0xf]
    %v1358 = vld [vmem:[#allocation8 + $0x40] sm:$0xf]
    %v1359 = vld [vmem:[#allocation8 + $0x44] sm:$0xf]
    %v1360 = vld [vmem:[#allocation8 + $0x48] sm:$0xf]
    %v1361 = vld [vmem:[#allocation8 + $0x4c] sm:$0xf]
    %v1362 = vld [vmem:[#allocation8 + $0x50] sm:$0xf]
    %v1363 = vld [vmem:[#allocation8 + $0x54] sm:$0xf]
    %v1364 = vld [vmem:[#allocation8 + $0x58] sm:$0xf]
    %v1365 = vld [vmem:[#allocation8 + $0x5c] sm:$0xf]
    %v1366 = vld [vmem:[#allocation8 + $0x60] sm:$0xf]
    %v1367 = vld [vmem:[#allocation8 + $0x64] sm:$0xf]
    %v1368 = vld [vmem:[#allocation8 + $0x68] sm:$0xf]
    %v1369 = vld [vmem:[#allocation8 + $0x6c] sm:$0xf]
    %v1370 = vld [vmem:[#allocation8 + $0x70] sm:$0xf]
    %v1371 = vld [vmem:[#allocation8 + $0x74] sm:$0xf]
    %v1372 = vld [vmem:[#allocation8 + $0x78] sm:$0xf]
    %v1373 = vld [vmem:[#allocation8 + $0x7c] sm:$0xf]
    %v1374 = vld [vmem:[%s6] sm:$0x1]
    %v1376 = vlaneseq
    %v1377 = vshrl.u32 %v1376, 7
    %v1378 = vsub.s32 0, %v1377
    %v1379 = vrot.slane %v1374, %v1378
    %v1413 = vunpack.c.l.b16 %v1342
    %v1414 = vunpack.c.l.b16 %v1343
    %v1415 = vunpack.c.l.b16 %v1344
    %v1416 = vunpack.c.l.b16 %v1345
    %v1417 = vunpack.c.l.b16 %v1346
    %v1418 = vunpack.c.l.b16 %v1347
    %v1419 = vunpack.c.l.b16 %v1348
    %v1420 = vunpack.c.l.b16 %v1349
    %v1421 = vunpack.c.l.b16 %v1350
    %v1422 = vunpack.c.l.b16 %v1351
    %v1423 = vunpack.c.l.b16 %v1352
    %v1424 = vunpack.c.l.b16 %v1353
    %v1425 = vunpack.c.l.b16 %v1354
    %v1426 = vunpack.c.l.b16 %v1355
    %v1427 = vunpack.c.l.b16 %v1356
    %v1428 = vunpack.c.l.b16 %v1357
    %v1429 = vunpack.c.l.b16 %v1358
    %v1430 = vunpack.c.l.b16 %v1359
    %v1431 = vunpack.c.l.b16 %v1360
    %v1432 = vunpack.c.l.b16 %v1361
    %v1433 = vunpack.c.l.b16 %v1362
    %v1434 = vunpack.c.l.b16 %v1363
    %v1435 = vunpack.c.l.b16 %v1364
    %v1436 = vunpack.c.l.b16 %v1365
    %v1437 = vunpack.c.l.b16 %v1366
    %v1438 = vunpack.c.l.b16 %v1367
    %v1439 = vunpack.c.l.b16 %v1368
    %v1440 = vunpack.c.l.b16 %v1369
    %v1441 = vunpack.c.l.b16 %v1370
    %v1442 = vunpack.c.l.b16 %v1371
    %v1443 = vunpack.c.l.b16 %v1372
    %v1444 = vunpack.c.l.b16 %v1373
    %v1445 = vpack.c.b16 %v1414, %v1413
    %v1446 = vpack.c.b16 %v1416, %v1415
    %v1447 = vpack.c.b16 %v1418, %v1417
    %v1448 = vpack.c.b16 %v1420, %v1419
    %v1449 = vpack.c.b16 %v1422, %v1421
    %v1450 = vpack.c.b16 %v1424, %v1423
    %v1451 = vpack.c.b16 %v1426, %v1425
    %v1452 = vpack.c.b16 %v1428, %v1427
    %v1453 = vpack.c.b16 %v1430, %v1429
    %v1454 = vpack.c.b16 %v1432, %v1431
    %v1455 = vpack.c.b16 %v1434, %v1433
    %v1456 = vpack.c.b16 %v1436, %v1435
    %v1457 = vpack.c.b16 %v1438, %v1437
    %v1458 = vpack.c.b16 %v1440, %v1439
    %v1459 = vpack.c.b16 %v1442, %v1441
    %v1460 = vpack.c.b16 %v1444, %v1443
    %1477 = vmatprep.subr.bf16.mxu0 0
    %1478 = vmatpush1.bf16.msra.mxu0 %v1452
    %1479 = vmatprep.subr.bf16.mxu0 0
    %1480 = vmatpush1.bf16.msra.mxu0 %v1451
    %1481 = vmatprep.subr.bf16.mxu0 0
    %1482 = vmatpush1.bf16.msra.mxu0 %v1450
    %1483 = vmatprep.subr.bf16.mxu0 0
    %1484 = vmatpush1.bf16.msra.mxu0 %v1449
    %1485 = vmatprep.subr.bf16.mxu0 0
    %1486 = vmatpush1.bf16.msra.mxu0 %v1448
    %1487 = vmatprep.subr.bf16.mxu0 0
    %1488 = vmatpush1.bf16.msra.mxu0 %v1447
    %1489 = vmatprep.subr.bf16.mxu0 0
    %1490 = vmatpush1.bf16.msra.mxu0 %v1446
    %1491 = vmatprep.subr.bf16.mxu0 0
    %1492 = vmatpush1.bf16.msra.mxu0 %v1445
    %1493 = vmatprep.subr.bf16.mxu0 0
    %1494 = vmatpush2.bf16.msra.mxu0 %v1460
    %1495 = vmatprep.subr.bf16.mxu0 0
    %1496 = vmatpush2.bf16.msra.mxu0 %v1459
    %1497 = vmatprep.subr.bf16.mxu0 0
    %1498 = vmatpush2.bf16.msra.mxu0 %v1458
    %1499 = vmatprep.subr.bf16.mxu0 0
    %1500 = vmatpush2.bf16.msra.mxu0 %v1457
    %1501 = vmatprep.subr.bf16.mxu0 0
    %1502 = vmatpush2.bf16.msra.mxu0 %v1456
    %1503 = vmatprep.subr.bf16.mxu0 0
    %1504 = vmatpush2.bf16.msra.mxu0 %v1455
    %1505 = vmatprep.subr.bf16.mxu0 0
    %1506 = vmatpush2.bf16.msra.mxu0 %v1454
    %1507 = vmatprep.subr.bf16.mxu0 0
    %1508 = vmatpush2.bf16.msra.mxu0 %v1453
    %1509 = vmatprep.mubr.bf16.mxu0 %v1341
    %1510 = vmatmul.mubr.bf16.gmra.mxu0 %v1340
    %v1511 = vpop.f32.mrf.mxu0
    %v1512 = vadd.f32 %v1379, %v1511
    %v1513 = vpop.f32.mrf.mxu0
    %v1514 = vpop.f32.mrf.mxu0
    %v1515 = vadd.f32 %v1379, %v1514
    %v1516 = vpop.f32.mrf.mxu0
    %1517 = vdwg.mxu0
    %1518 = vst [vmem:[#allocation10] sm:$0xff] %v1512
    %1519 = vst [vmem:[#allocation10 + $0x8] sm:$0xff] %v1515
    // Predicated region
    $region46: #{tpu_custom_call.1} parent=1 // pred_check
      _
    $region47: #{tpu_custom_call.1} parent=1 // pred_check_branch
      %1521 = sbr.rel (0) target = $region49
    $region48: #{tpu_custom_call.1} parent=1 // pred_region
      %s1523 = ssub.s32 256, 256
      %1524 = vsyncadd [#allocation4], %s1523
      %s1525 = sshll.u32 [#allocation10], 4
      %s1526 = int_to_ptr.vmem [resolvable:$true] %s1525
      %1531 = dma.vmem_to_hbm [thread:$0]  %s1526, 256, %s7, [#allocation4], 128, 128, 8
    $region49: #{tpu_custom_call.1} parent=1 // pred_fallthru
      _
    // Predicated region
    $region50: #{tpu_custom_call.1} parent=1 // pred_check
      _
    $region51: #{tpu_custom_call.1} parent=1 // pred_check_branch
      %1533 = sbr.rel (0) target = $region53
    $region52: #{tpu_custom_call.1} parent=1 // pred_region
      %1534 = dma.done [#allocation4], 256
    $region53: #{tpu_custom_call.1} parent=1 // pred_fallthru
      _
    %1535 = vsyncpa [#allocation3], 1
    %1536 = vsyncpa [#allocation6], 1
    %1537 = vsyncpa [#allocation9], 1
    %1538 = vsyncpa [#allocation4], 1

</llo_original>
